<compile_context>
chip_gen: v6e
topology: v6e:2x2x1
jax: 0.10.0
libtpu: 0.0.40
codegen_flags: <defaults>
</compile_context>

<pallas_src>
import math

import jax
import jax.numpy as jnp
from jax.experimental import pallas as pl
from jax.experimental.pallas import tpu as pltpu

_MIB = 1024 * 1024


# ------------------------------ small helpers -------------------------------

def _round_up(x, m):
    return ((x + m - 1) // m) * m


def _sublane_granule(dtype):
    bits = jnp.dtype(dtype).itemsize * 8
    if bits >= 32:
        return 8
    if bits == 16:
        return 16
    return 32


def _largest_divisor_block(total, max_block, granule):
    """Largest multiple of `granule` <= max_block that divides `total`
    (`total` is already a multiple of `granule`, so 128 always works)."""
    cap = min(total, max(granule, (max_block // granule) * granule))
    for b in range(cap, granule - 1, -granule):
        if total % b == 0:
            return b
    return granule


def _split_rows_for_two_cores(M, bm, granule):
    """Shrink bm so the row axis has >= 2 grid steps (keeps both v7x TCs fed)."""
    if M > granule and pl.cdiv(M, bm) < 2:
        bm = max(granule, _round_up(pl.cdiv(M, 2), granule))
    return bm


# ------------------------------ Pallas kernels ------------------------------

def _matmul_bias_resident_kernel(x_ref, w_ref, b_ref, o_ref):
    """Whole (padded) weight + bias are VMEM-resident; one MXU pass per row tile."""
    acc = jnp.dot(x_ref[...], w_ref[...], preferred_element_type=jnp.float32)
    o_ref[...] = (acc + b_ref[...]).astype(o_ref.dtype)


def _matmul_bias_tiled_kernel(x_ref, w_ref, b_ref, o_ref, acc_ref):
    """(i, j, k) tiling fallback for weights too large to keep resident."""
    k = pl.program_id(2)

    @pl.when(k == 0)
    def _():
        # Seed the accumulator with the bias: no extra VPU add in the epilogue.
        acc_ref[...] = jnp.broadcast_to(b_ref[...], acc_ref.shape)

    acc_ref[...] += jnp.dot(x_ref[...], w_ref[...],
                            preferred_element_type=jnp.float32)

    @pl.when(k == pl.num_programs(2) - 1)
    def _():
        o_ref[...] = acc_ref[...].astype(o_ref.dtype)


# ------------------------------ kernel wrapper ------------------------------

def matmul_bias_pallas(x, w, b, *,
                       out_dtype=None,
                       compute_dtype=None,
                       block_m=1024, block_n=512, block_k=512,
                       vmem_budget_bytes=28 * _MIB,
                       weight_resident_limit_bytes=16 * _MIB):
    """out = x @ w + b   with x: (M, K), w: (K, N), b: (N,), fused on TPU."""
    M, K = x.shape
    Kw, N = w.shape
    assert Kw == K and b.shape == (N,)

    out_dtype = out_dtype or x.dtype
    compute_dtype = compute_dtype or w.dtype
    cbytes = jnp.dtype(compute_dtype).itemsize
    obytes = jnp.dtype(out_dtype).itemsize
    gm = _sublane_granule(compute_dtype)

    x = x.astype(compute_dtype)
    w = w.astype(compute_dtype)
    b2 = b.reshape(1, N).astype(jnp.float32)

    # Lane-facing dims padded to multiples of 128 (zero pads are exact).
    Kp = _round_up(K, 128)
    Np = _round_up(N, 128)

    weight_resident = 2 * Kp * Np * cbytes <= weight_resident_limit_bytes

    if weight_resident:
        bm = min(block_m, _round_up(M, gm))
        bm = _split_rows_for_two_cores(M, bm, gm)

        def fp(bm_):                                  # VMEM footprint estimate
            return (2 * bm_ * Kp * cbytes             # x tiles (double-buffered)
                    + 2 * Kp * Np * cbytes            # resident weight (worst case 2x)
                    + 2 * bm_ * Np * obytes           # output tiles
                    + 2 * Np * 4)                     # bias

        while fp(bm) > vmem_budget_bytes and bm > gm:
            bm = max(gm, _round_up(bm // 2, gm))
        Mp = _round_up(M, bm)

        if (Mp, Kp) != (M, K):
            x = jnp.pad(x, ((0, Mp - M), (0, Kp - K)))
        if (Kp, Np) != (K, N):
            w = jnp.pad(w, ((0, Kp - K), (0, Np - N)))
            b2 = jnp.pad(b2, ((0, 0), (0, Np - N)))

        out = pl.pallas_call(
            _matmul_bias_resident_kernel,
            out_shape=jax.ShapeDtypeStruct((Mp, Np), out_dtype),
            grid_spec=pltpu.PrefetchScalarGridSpec(
                num_scalar_prefetch=0,
                grid=(Mp // bm,),
                in_specs=[
                    pl.BlockSpec((bm, Kp), lambda i: (i, 0)),
                    pl.BlockSpec((Kp, Np), lambda i: (0, 0)),   # stays resident
                    pl.BlockSpec((1, Np), lambda i: (0, 0)),    # stays resident
                ],
                out_specs=pl.BlockSpec((bm, Np), lambda i: (i, 0)),
            ),
            compiler_params=pltpu.CompilerParams(
                dimension_semantics=("parallel",),
                vmem_limit_bytes=int(min(48 * _MIB, fp(bm) + 8 * _MIB))),
        )(x, w, b2)
    else:
        # TODO(synk): a two-level pipeline (weight K-chunks streamed per row
        # tile) could cut weight traffic further; plain (M, N, K) tiling with a
        # resident f32 accumulator is used instead.
        bn = _largest_divisor_block(Np, block_n, 128)
        bk = _largest_divisor_block(Kp, block_k, 128)
        bm = min(block_m, _round_up(M, gm))
        bm = _split_rows_for_two_cores(M, bm, gm)

        def fp(bm_):
            return (2 * bm_ * bk * cbytes + 2 * bk * bn * cbytes
                    + 2 * bm_ * bn * obytes + bm_ * bn * 4 + 2 * bn * 4)

        while fp(bm) > vmem_budget_bytes and bm > gm:
            bm = max(gm, _round_up(bm // 2, gm))
        Mp = _round_up(M, bm)

        if (Mp, Kp) != (M, K):
            x = jnp.pad(x, ((0, Mp - M), (0, Kp - K)))
        if (Kp, Np) != (K, N):
            w = jnp.pad(w, ((0, Kp - K), (0, Np - N)))
            b2 = jnp.pad(b2, ((0, 0), (0, Np - N)))

        out = pl.pallas_call(
            _matmul_bias_tiled_kernel,
            out_shape=jax.ShapeDtypeStruct((Mp, Np), out_dtype),
            grid_spec=pltpu.PrefetchScalarGridSpec(
                num_scalar_prefetch=0,
                grid=(Mp // bm, Np // bn, Kp // bk),
                in_specs=[
                    pl.BlockSpec((bm, bk), lambda i, j, k: (i, k)),
                    pl.BlockSpec((bk, bn), lambda i, j, k: (k, j)),
                    pl.BlockSpec((1, bn), lambda i, j, k: (0, j)),
                ],
                out_specs=pl.BlockSpec((bm, bn), lambda i, j, k: (i, j)),
                scratch_shapes=[pltpu.VMEM((bm, bn), jnp.float32)],
            ),
            compiler_params=pltpu.CompilerParams(
                dimension_semantics=("parallel", "parallel", "arbitrary"),
                vmem_limit_bytes=int(min(48 * _MIB, fp(bm) + 8 * _MIB))),
        )(x, w, b2)

    if (Mp, Np) != (M, N):
        out = out[:M, :N]
    return out


# ------------------------------ model (forward) -----------------------------

def prepare_qkv_lowrank_params(params, compute_dtype=jnp.bfloat16):
    """One-time parameter fusion (hoisted out of the per-step forward):
    W_cat = [W_qk | W_v], b_cat = [b_qk ; b_v], weight cast to the MXU dtype."""
    w_cat = jnp.concatenate([params['qk_w'], params['v_w']],
                            axis=1).astype(compute_dtype)            # (dim, 3*dim)
    b_cat = jnp.concatenate([params['qk_b'], params['v_b']],
                            axis=0).astype(jnp.float32)              # (3*dim,)
    return {'w_cat': w_cat, 'b_cat': b_cat}


def qkv_lowrank_forward(x, prepared):
    """QKV_lowrank.forward: concat([qk(x), v(x)], -1) as one fused matmul+bias.
    (The module's low_rank / memory_blocks / weight_factor args are unused in
    forward(), so they have no kernel counterpart.)"""
    dim = x.shape[-1]
    n_out = prepared['w_cat'].shape[1]
    lead = x.shape[:-1]
    m = math.prod(lead)
    out = matmul_bias_pallas(x.reshape(m, dim),
                             prepared['w_cat'], prepared['b_cat'],
                             out_dtype=x.dtype)
    return out.reshape(*lead, n_out)


# ----------------------------------- main -----------------------------------

if __name__ == "__main__":
    # Small, tile-aligned shapes: dim=128 -> output width 3*dim = 384 (lane-
    # dense, multiple of 128); M = B*seq = 512 -> two row tiles in the grid,
    # so both TensorCores get work on v7x.
    B, seq, dim = 2, 256, 128

    key = jax.random.PRNGKey(0)
    kx, k1, k2, k3, k4 = jax.random.split(key, 5)
    x = jax.random.normal(kx, (B, seq, dim), jnp.float32)
    raw_params = dict(
        qk_w=jax.random.normal(k1, (dim, 2 * dim), jnp.float32) * 0.02,
        qk_b=jax.random.normal(k2, (2 * dim,), jnp.float32) * 0.02,
        v_w=jax.random.normal(k3, (dim, dim), jnp.float32) * 0.02,
        v_b=jax.random.normal(k4, (dim,), jnp.float32) * 0.02,
    )
    # Hoisted out of the step: fuse + cast parameters once.
    prepared = prepare_qkv_lowrank_params(raw_params)

    fwd = jax.jit(qkv_lowrank_forward)
    out = fwd(x, prepared)
    jax.block_until_ready(out)
    assert out.shape == (B, seq, 3 * dim) and out.dtype == x.dtype

    # Reference matching the bf16-MXU compute path (bf16-rounded operands,
    # f32 accumulation) -> tight tolerance.
    xb = x.astype(jnp.bfloat16).astype(jnp.float32)
    wb = jnp.concatenate([raw_params['qk_w'], raw_params['v_w']],
                         axis=1).astype(jnp.bfloat16).astype(jnp.float32)
    bb = jnp.concatenate([raw_params['qk_b'], raw_params['v_b']], axis=0)
    ref_bf16 = jnp.dot(xb, wb, precision=jax.lax.Precision.HIGHEST) + bb
    err = float(jnp.max(jnp.abs(out - ref_bf16)))
    assert err < 2e-3, f"max abs err vs bf16-compute reference: {err}"

    # Looser sanity check against the full-f32 reference (bf16 compute error).
    ref_f32 = jnp.concatenate(
        [jnp.dot(x, raw_params['qk_w'], precision=jax.lax.Precision.HIGHEST)
         + raw_params['qk_b'],
         jnp.dot(x, raw_params['v_w'], precision=jax.lax.Precision.HIGHEST)
         + raw_params['v_b']],
        axis=-1)
    assert float(jnp.max(jnp.abs(out - ref_f32))) < 5e-2

    print("KERNEL_OK")
</pallas_src>

<mosaic_0001>
module attributes {stable_mosaic.version = 11 : i64} {
  func.func @_matmul_bias_resident_kernel(%arg0: i32, %arg1: memref<256x128xbf16, #tpu.memory_space<vmem>>, %arg2: memref<128x384xbf16, #tpu.memory_space<vmem>>, %arg3: memref<1x384xf32, #tpu.memory_space<vmem>>, %arg4: memref<256x384xf32, #tpu.memory_space<vmem>>) attributes {dimension_semantics = [#tpu.dimension_semantics<parallel>], iteration_bounds = array<i64: 2>, scalar_prefetch = 0 : i64, scratch_operands = 0 : i64, tpu.core_type = #tpu.core_type<tc>, window_params = [{transform_indices = @transform_0, window_bounds = array<i64: 256, 128>}, {pipeline_mode = #tpu.pipeline_mode<synchronous>, transform_indices = @transform_1, window_bounds = array<i64: 128, 384>}, {pipeline_mode = #tpu.pipeline_mode<synchronous>, transform_indices = @transform_2, window_bounds = array<i64: 1, 384>}, {transform_indices = @transform_3, window_bounds = array<i64: 256, 384>}]} {
    %c0 = arith.constant 0 : index
    %c0_0 = arith.constant 0 : index
    %0 = vector.load %arg1[%c0, %c0_0] : memref<256x128xbf16, #tpu.memory_space<vmem>>, vector<256x128xbf16>
    %c0_1 = arith.constant 0 : index
    %c0_2 = arith.constant 0 : index
    %1 = vector.load %arg2[%c0_1, %c0_2] : memref<128x384xbf16, #tpu.memory_space<vmem>>, vector<128x384xbf16>
    %cst = arith.constant dense<0.000000e+00> : vector<256x384xf32>
    %2 = tpu.matmul %0, %1, %cst {dimension_numbers = #tpu.dot_dimension_numbers<[1], [0], [0], [1], [0, 0, 1, 1], [], []>} : vector<256x128xbf16>, vector<128x384xbf16>, vector<256x384xf32> -> vector<256x384xf32>
    %c0_3 = arith.constant 0 : index
    %c0_4 = arith.constant 0 : index
    %3 = vector.load %arg3[%c0_3, %c0_4] : memref<1x384xf32, #tpu.memory_space<vmem>>, vector<1x384xf32>
    %4 = vector.broadcast %3 : vector<1x384xf32> to vector<256x384xf32>
    %5 = arith.addf %2, %4 : vector<256x384xf32>
    %c0_5 = arith.constant 0 : index
    %c0_6 = arith.constant 0 : index
    %6 = vector.load %arg4[%c0_5, %c0_6] : memref<256x384xf32, #tpu.memory_space<vmem>>, vector<256x384xf32>
    tpu.vector_store %arg4[%c0_5, %c0_6], %5 {strides = array<i32>} : memref<256x384xf32, #tpu.memory_space<vmem>>, vector<256x384xf32>,
    return
  }
  func.func @transform_0(%arg0: i32) -> (i32, i32) {
    %c0_i32 = arith.constant 0 : i32
    %c0_i32_0 = arith.constant 0 : i32
    return %arg0, %c0_i32 : i32, i32
  }
  func.func @transform_1(%arg0: i32) -> (i32, i32) {
    %c0_i32 = arith.constant 0 : i32
    %c0_i32_0 = arith.constant 0 : i32
    %c0_i32_1 = arith.constant 0 : i32
    return %c0_i32, %c0_i32_0 : i32, i32
  }
  func.func @transform_2(%arg0: i32) -> (i32, i32) {
    %c0_i32 = arith.constant 0 : i32
    %c0_i32_0 = arith.constant 0 : i32
    %c0_i32_1 = arith.constant 0 : i32
    return %c0_i32, %c0_i32_0 : i32, i32
  }
  func.func @transform_3(%arg0: i32) -> (i32, i32) {
    %c0_i32 = arith.constant 0 : i32
    %c0_i32_0 = arith.constant 0 : i32
    return %arg0, %c0_i32 : i32, i32
  }
}

</mosaic_0001>

<llo_original>
// kernel: qkv_lowrank_forward.1
$region0: #{qkv_lowrank_forward.1}
  #allocation0 [shape = 'u32[]', space=smem, size = 0x4, offset = 0x4, fixed_abs, tag = 'smem constant byte address 0x4 - core index']
  #allocation1 [shape = 'u32[144,128]{1,0:T(1,128)}', space=vmem, size = 0x12000, scoped, tag = 'internal scratch']
  %s0 = inlined_call_operand.vmem [shape: bf16[512,128], index: 0, kind: input, shape index: {}]
  %s1 = inlined_call_operand.vmem [shape: bf16[128,384], index: 1, kind: input, shape index: {}]
  %s2 = inlined_call_operand.vmem [shape: f32[1,384], index: 2, kind: input, shape index: {}]
  %s3 = inlined_call_operand.hbm [shape: f32[512,384], index: 3, kind: output, shape index: {}]
  %s4 = sld [smem:[#allocation0]]
  $region45: #{qkv_lowrank_forward.1} parent=0
    _
  %s6 = ssub.s32 1, %s4
  %s7 = scalar_select 0, %s6, %s4
  $region1: #{qkv_lowrank_forward.1} parent=0
    #allocation2 [shape = 'u8[786432]{0}', space=vmem, size = 0xc0000, scoped, tag = 'output window, operand 0']
    #allocation3 [shape = 's32[2]{0}', space=sflag, size = 0x8, scoped, tag = 'scoped memory for qkv_lowrank_forward.1']
    %8 = vsyncpa [#allocation3], 0
    %s9 = scalar_lea.sflag [#allocation3], 1
    %10 = vsyncpa %s9, 0
    loop: start=0, step=1, limit=4
    $region2: #{qkv_lowrank_forward.1} parent=1 // loop_pre_header
      _
    $region3: #{qkv_lowrank_forward.1} parent=1 // loop_header
      %s12 = sphi 0, %s16
      %p13 = scmp.ge.s32.totalorder %s12, 4
      %s22 = sphi 0, %s24
      %s25 = sphi 0, %s22
      %s26 = sphi 0, %s25
      %s42 = sphi 0, %s26
      %s46 = sphi 0, %s46
      %s48 = sphi 0, %s46
      %s49 = sphi 0, %s48
      %s63 = sphi 0, %s49
      %s67 = sphi 0, %s67
      %s69 = sphi 0, %s67
      %s70 = sphi 0, %s69
      %s84 = sphi 0, %s70
      %s90 = sphi 0, %s92
      %s93 = sphi 0, %s90
      %s94 = sphi 0, %s93
      %s110 = sphi 0, %s94
    $region4: #{qkv_lowrank_forward.1} parent=1 // loop_header_branch
      %15 = sbr.rel (%p13) target = $region8
    $region5: #{qkv_lowrank_forward.1} parent=1 // loop_body
      %s17 = ssub.s32 %s12, 1
      %s18 = ssub.s32 %s12, 2
      %s19 = sadd.s32 %s12, 1
      %s20 = ssub.s32 %s12, %s19
      %p21 = scmp.eq.s32.totalorder %s20, 0
      %s23 = sadd.s32 %s22, 1
      %s24 = scalar_select %p21, %s22, %s23
      %p27 = pneg %p21
      %p28 = scmp.eq.s32.totalorder %s12, 1
      %p29 = por %p27, %p28
      %p30 = scmp.ne.s32.totalorder %s22, %s25
      %p31 = scmp.eq.s32.totalorder %s12, 0
      %p32 = por %p30, %p31
      %p33 = scmp.ne.s32.totalorder %s22, %s25
      %p34 = scmp.eq.s32.totalorder %s17, 1
      %p35 = por %p33, %p34
      %p36 = scmp.ne.s32.totalorder %s25, %s26
      %p37 = scmp.eq.s32.totalorder %s17, 0
      %p38 = por %p36, %p37
      %p39 = scmp.ne.s32.totalorder %s25, %s26
      %p40 = scmp.eq.s32.totalorder %s18, 1
      %p41 = por %p39, %p40
      %p43 = scmp.ne.s32.totalorder %s26, %s42
      %p44 = scmp.eq.s32.totalorder %s18, 0
      %p45 = por %p43, %p44
      %s47 = sadd.s32 %s46, 1
      %p50 = scmp.eq.s32.totalorder %s12, 1
      %p51 = scmp.ne.s32.totalorder %s46, %s48
      %p52 = scmp.eq.s32.totalorder %s12, 0
      %p53 = por %p51, %p52
      %p54 = scmp.ne.s32.totalorder %s46, %s48
      %p55 = scmp.eq.s32.totalorder %s17, 1
      %p56 = por %p54, %p55
      %p57 = scmp.ne.s32.totalorder %s48, %s49
      %p58 = scmp.eq.s32.totalorder %s17, 0
      %p59 = por %p57, %p58
      %p60 = scmp.ne.s32.totalorder %s48, %s49
      %p61 = scmp.eq.s32.totalorder %s18, 1
      %p62 = por %p60, %p61
      %p64 = scmp.ne.s32.totalorder %s49, %s63
      %p65 = scmp.eq.s32.totalorder %s18, 0
      %p66 = por %p64, %p65
      %s68 = sadd.s32 %s67, 1
      %p71 = scmp.eq.s32.totalorder %s12, 1
      %p72 = scmp.ne.s32.totalorder %s67, %s69
      %p73 = scmp.eq.s32.totalorder %s12, 0
      %p74 = por %p72, %p73
      %p75 = scmp.ne.s32.totalorder %s67, %s69
      %p76 = scmp.eq.s32.totalorder %s17, 1
      %p77 = por %p75, %p76
      %p78 = scmp.ne.s32.totalorder %s69, %s70
      %p79 = scmp.eq.s32.totalorder %s17, 0
      %p80 = por %p78, %p79
      %p81 = scmp.ne.s32.totalorder %s69, %s70
      %p82 = scmp.eq.s32.totalorder %s18, 1
      %p83 = por %p81, %p82
      %p85 = scmp.ne.s32.totalorder %s70, %s84
      %p86 = scmp.eq.s32.totalorder %s18, 0
      %p87 = por %p85, %p86
      %s88 = ssub.s32 %s12, %s19
      %p89 = scmp.eq.s32.totalorder %s88, 0
      %s91 = sadd.s32 %s90, 1
      %s92 = scalar_select %p89, %s90, %s91
      %p95 = pneg %p89
      %p96 = scmp.eq.s32.totalorder %s12, 1
      %p97 = por %p95, %p96
      %p98 = scmp.ne.s32.totalorder %s90, %s93
      %p99 = scmp.eq.s32.totalorder %s12, 0
      %p100 = por %p98, %p99
      %p101 = scmp.ne.s32.totalorder %s90, %s93
      %p102 = scmp.eq.s32.totalorder %s17, 1
      %p103 = por %p101, %p102
      %p104 = scmp.ne.s32.totalorder %s93, %s94
      %p105 = scmp.eq.s32.totalorder %s17, 0
      %p106 = por %p104, %p105
      %p107 = scmp.ne.s32.totalorder %s93, %s94
      %p108 = scmp.eq.s32.totalorder %s18, 1
      %p109 = por %p107, %p108
      %p111 = scmp.ne.s32.totalorder %s94, %s110
      %p112 = scmp.eq.s32.totalorder %s18, 0
      %p113 = por %p111, %p112
      %p114 = scmp.le.s32.totalorder 1, %s12
      %p115 = scmp.lt.s32.totalorder %s12, 3
      %p116 = pnand %p114, %p115
      %p117 = pneg %p116
      // Predicated region
      $region9: #{qkv_lowrank_forward.1} parent=5 // pred_check
        _
      $region10: #{qkv_lowrank_forward.1} parent=5 // pred_check_branch
        %119 = sbr.rel (%p116) target = $region12
      $region11: #{qkv_lowrank_forward.1} parent=5 // pred_region
        %s120 = ssub.s32 %s12, 1
        // Predicated region
        $region13: #{qkv_lowrank_forward.1} parent=11 // pred_check
          %p121 = pneg %p59
        $region14: #{qkv_lowrank_forward.1} parent=11 // pred_check_branch
          %123 = sbr.rel (%p121) target = $region16
        $region15: #{qkv_lowrank_forward.1} parent=11 // pred_region
          _
        $region16: #{qkv_lowrank_forward.1} parent=11 // pred_fallthru
          _
        // Predicated region
        $region17: #{qkv_lowrank_forward.1} parent=11 // pred_check
          %p124 = pneg %p80
        $region18: #{qkv_lowrank_forward.1} parent=11 // pred_check_branch
          %126 = sbr.rel (%p124) target = $region20
        $region19: #{qkv_lowrank_forward.1} parent=11 // pred_region
          _
        $region20: #{qkv_lowrank_forward.1} parent=11 // pred_fallthru
          _
      $region12: #{qkv_lowrank_forward.1} parent=5 // pred_fallthru
        _
      %p127 = scmp.lt.s32.totalorder %s12, 2
      // Predicated region
      $region21: #{qkv_lowrank_forward.1} parent=5 // pred_check
        %p128 = pneg %p127
      $region22: #{qkv_lowrank_forward.1} parent=5 // pred_check_branch
        %130 = sbr.rel (%p128) target = $region24
      $region23: #{qkv_lowrank_forward.1} parent=5 // pred_region
        // Predicated region
        $region25: #{qkv_lowrank_forward.1} parent=23 // pred_check
          %p131 = pneg %p32
        $region26: #{qkv_lowrank_forward.1} parent=23 // pred_check_branch
          %133 = sbr.rel (%p131) target = $region28
        $region27: #{qkv_lowrank_forward.1} parent=23 // pred_region
          %s134 = smul.u32 32, %s12
          %p135 = scmp.lt.s32.totalorder %s134, 63
          %s136 = scalar_select %p135, %s134, 63
          %s137 = smul.addr %s136, 4
          %s138 = scalar_lea.vmem %s0, %s137
          %s139 = smul.u32 32, %s12
        $region28: #{qkv_lowrank_forward.1} parent=23 // pred_fallthru
          _
      $region24: #{qkv_lowrank_forward.1} parent=5 // pred_fallthru
        _
      %p140 = scmp.le.s32.totalorder 1, %s12
      %p141 = scmp.lt.s32.totalorder %s12, 3
      %p142 = pnand %p140, %p141
      %p143 = pneg %p142
      // Predicated region
      $region29: #{qkv_lowrank_forward.1} parent=5 // pred_check
        _
      $region30: #{qkv_lowrank_forward.1} parent=5 // pred_check_branch
        %145 = sbr.rel (%p142) target = $region32
      $region31: #{qkv_lowrank_forward.1} parent=5 // pred_region
        %s146 = ssub.s32 %s12, 1
        %s147 = smul.u32 32, %s17
        %p148 = scmp.lt.s32.totalorder %s147, 63
        %s149 = scalar_select %p148, %s147, 63
        %s150 = smul.addr %s149, 4
        %s151 = scalar_lea.vmem %s0, %s150
        %p152 = pneg %p38
        %p153 = pneg %p35
        %p154 = pneg %p59
        %p155 = pneg %p56
        %p156 = pneg %p80
        %p157 = pneg %p77
        %p158 = pneg %p106
        %p159 = pneg %p103
        %s160 = sand.u32 %s93, 1
        %s161 = scalar_lea.sflag [#allocation3], %s160
        %s162 = sand.u32 %s93, 1
        %s163 = smul.addr %s162, 768
        %s164 = scalar_lea.vmem [#allocation2], %s163
        %s165 = smul.u32 32, %s17
        %p166 = scmp.lt.s32.totalorder %s165, 63
        %s167 = scalar_select %p166, %s165, 63
        %s168 = smul.addr %s167, 4
        %s169 = scalar_lea.vmem %s0, %s168
        %s170 = smul.u32 32, %s17
        %s171 = smul.u32 32, %s17
        %v173 = vld [vmem:[%s169] sm:$0xf]
        %v174 = vld [vmem:[%s169 + $0x4] sm:$0xf]
        %v175 = vld [vmem:[%s169 + $0x8] sm:$0xf]
        %v176 = vld [vmem:[%s169 + $0xc] sm:$0xf]
        %v177 = vld [vmem:[%s169 + $0x10] sm:$0xf]
        %v178 = vld [vmem:[%s169 + $0x14] sm:$0xf]
        %v179 = vld [vmem:[%s169 + $0x18] sm:$0xf]
        %v180 = vld [vmem:[%s169 + $0x1c] sm:$0xf]
        %v181 = vld [vmem:[%s169 + $0x20] sm:$0xf]
        %v182 = vld [vmem:[%s169 + $0x24] sm:$0xf]
        %v183 = vld [vmem:[%s169 + $0x28] sm:$0xf]
        %v184 = vld [vmem:[%s169 + $0x2c] sm:$0xf]
        %v185 = vld [vmem:[%s169 + $0x30] sm:$0xf]
        %v186 = vld [vmem:[%s169 + $0x34] sm:$0xf]
        %v187 = vld [vmem:[%s169 + $0x38] sm:$0xf]
        %v188 = vld [vmem:[%s169 + $0x3c] sm:$0xf]
        %v189 = vld [vmem:[%s169 + $0x40] sm:$0xf]
        %v190 = vld [vmem:[%s169 + $0x44] sm:$0xf]
        %v191 = vld [vmem:[%s169 + $0x48] sm:$0xf]
        %v192 = vld [vmem:[%s169 + $0x4c] sm:$0xf]
        %v193 = vld [vmem:[%s169 + $0x50] sm:$0xf]
        %v194 = vld [vmem:[%s169 + $0x54] sm:$0xf]
        %v195 = vld [vmem:[%s169 + $0x58] sm:$0xf]
        %v196 = vld [vmem:[%s169 + $0x5c] sm:$0xf]
        %v197 = vld [vmem:[%s169 + $0x60] sm:$0xf]
        %v198 = vld [vmem:[%s169 + $0x64] sm:$0xf]
        %v199 = vld [vmem:[%s169 + $0x68] sm:$0xf]
        %v200 = vld [vmem:[%s169 + $0x6c] sm:$0xf]
        %v201 = vld [vmem:[%s169 + $0x70] sm:$0xf]
        %v202 = vld [vmem:[%s169 + $0x74] sm:$0xf]
        %v203 = vld [vmem:[%s169 + $0x78] sm:$0xf]
        %v204 = vld [vmem:[%s169 + $0x7c] sm:$0xf]
        %v205 = vld [vmem:[%s1] sm:$0xff]
        %v206 = vld [vmem:[%s1 + $0x8] sm:$0xf]
        %v207 = vld [vmem:[%s1 + $0xc] sm:$0xff]
        %v208 = vld [vmem:[%s1 + $0x14] sm:$0xf]
        %v209 = vld [vmem:[%s1 + $0x18] sm:$0xff]
        %v210 = vld [vmem:[%s1 + $0x20] sm:$0xf]
        %v211 = vld [vmem:[%s1 + $0x24] sm:$0xff]
        %v212 = vld [vmem:[%s1 + $0x2c] sm:$0xf]
        %v213 = vld [vmem:[%s1 + $0x30] sm:$0xff]
        %v214 = vld [vmem:[%s1 + $0x38] sm:$0xf]
        %v215 = vld [vmem:[%s1 + $0x3c] sm:$0xff]
        %v216 = vld [vmem:[%s1 + $0x44] sm:$0xf]
        %v217 = vld [vmem:[%s1 + $0x48] sm:$0xff]
        %v218 = vld [vmem:[%s1 + $0x50] sm:$0xf]
        %v219 = vld [vmem:[%s1 + $0x54] sm:$0xff]
        %v220 = vld [vmem:[%s1 + $0x5c] sm:$0xf]
        %v221 = vld [vmem:[%s1 + $0x60] sm:$0xff]
        %v222 = vld [vmem:[%s1 + $0x68] sm:$0xf]
        %v223 = vld [vmem:[%s1 + $0x6c] sm:$0xff]
        %v224 = vld [vmem:[%s1 + $0x74] sm:$0xf]
        %v225 = vld [vmem:[%s1 + $0x78] sm:$0xff]
        %v226 = vld [vmem:[%s1 + $0x80] sm:$0xf]
        %v227 = vld [vmem:[%s1 + $0x84] sm:$0xff]
        %v228 = vld [vmem:[%s1 + $0x8c] sm:$0xf]
        %v229 = vld [vmem:[%s1 + $0x90] sm:$0xff]
        %v230 = vld [vmem:[%s1 + $0x98] sm:$0xf]
        %v231 = vld [vmem:[%s1 + $0x9c] sm:$0xff]
        %v232 = vld [vmem:[%s1 + $0xa4] sm:$0xf]
        %v233 = vld [vmem:[%s1 + $0xa8] sm:$0xff]
        %v234 = vld [vmem:[%s1 + $0xb0] sm:$0xf]
        %v235 = vld [vmem:[%s1 + $0xb4] sm:$0xff]
        %v236 = vld [vmem:[%s1 + $0xbc] sm:$0xf]
        %v237 = vld [vmem:[%s2] sm:$0x7]
        %v239 = vlaneseq
        %v240 = vshrl.u32 %v239, 7
        %v241 = vsub.s32 0, %v240
        %v242 = vrot.slane %v237, %v241
        %v243 = vlaneseq
        %v244 = vshrl.u32 %v243, 7
        %v245 = vsub.s32 1, %v244
        %v246 = vrot.slane %v237, %v245
        %v247 = vlaneseq
        %v248 = vshrl.u32 %v247, 7
        %v249 = vsub.s32 2, %v248
        %v250 = vrot.slane %v237, %v249
        %v286 = vunpack.c.l.b16 %v173
        %v287 = vunpack.c.l.b16 %v174
        %v288 = vunpack.c.l.b16 %v175
        %v289 = vunpack.c.l.b16 %v176
        %v290 = vunpack.c.l.b16 %v177
        %v291 = vunpack.c.l.b16 %v178
        %v292 = vunpack.c.l.b16 %v179
        %v293 = vunpack.c.l.b16 %v180
        %v294 = vunpack.c.l.b16 %v181
        %v295 = vunpack.c.l.b16 %v182
        %v296 = vunpack.c.l.b16 %v183
        %v297 = vunpack.c.l.b16 %v184
        %v298 = vunpack.c.l.b16 %v185
        %v299 = vunpack.c.l.b16 %v186
        %v300 = vunpack.c.l.b16 %v187
        %v301 = vunpack.c.l.b16 %v188
        %v302 = vunpack.c.l.b16 %v189
        %v303 = vunpack.c.l.b16 %v190
        %v304 = vunpack.c.l.b16 %v191
        %v305 = vunpack.c.l.b16 %v192
        %v306 = vunpack.c.l.b16 %v193
        %v307 = vunpack.c.l.b16 %v194
        %v308 = vunpack.c.l.b16 %v195
        %v309 = vunpack.c.l.b16 %v196
        %v310 = vunpack.c.l.b16 %v197
        %v311 = vunpack.c.l.b16 %v198
        %v312 = vunpack.c.l.b16 %v199
        %v313 = vunpack.c.l.b16 %v200
        %v314 = vunpack.c.l.b16 %v201
        %v315 = vunpack.c.l.b16 %v202
        %v316 = vunpack.c.l.b16 %v203
        %v317 = vunpack.c.l.b16 %v204
        %v318 = vpack.c.b16 %v287, %v286
        %v319 = vpack.c.b16 %v289, %v288
        %v320 = vpack.c.b16 %v291, %v290
        %v321 = vpack.c.b16 %v293, %v292
        %v322 = vpack.c.b16 %v295, %v294
        %v323 = vpack.c.b16 %v297, %v296
        %v324 = vpack.c.b16 %v299, %v298
        %v325 = vpack.c.b16 %v301, %v300
        %v326 = vpack.c.b16 %v303, %v302
        %v327 = vpack.c.b16 %v305, %v304
        %v328 = vpack.c.b16 %v307, %v306
        %v329 = vpack.c.b16 %v309, %v308
        %v330 = vpack.c.b16 %v311, %v310
        %v331 = vpack.c.b16 %v313, %v312
        %v332 = vpack.c.b16 %v315, %v314
        %v333 = vpack.c.b16 %v317, %v316
        %v382 = vunpack.c.l.b16 %v205
        %v383 = vunpack.c.h.b16 %v205
        %v384 = vunpack.c.l.b16 %v206
        %v385 = vunpack.c.l.b16 %v207
        %v386 = vunpack.c.h.b16 %v207
        %v387 = vunpack.c.l.b16 %v208
        %v388 = vunpack.c.l.b16 %v209
        %v389 = vunpack.c.h.b16 %v209
        %v390 = vunpack.c.l.b16 %v210
        %v391 = vunpack.c.l.b16 %v211
        %v392 = vunpack.c.h.b16 %v211
        %v393 = vunpack.c.l.b16 %v212
        %v394 = vunpack.c.l.b16 %v213
        %v395 = vunpack.c.h.b16 %v213
        %v396 = vunpack.c.l.b16 %v214
        %v397 = vunpack.c.l.b16 %v215
        %v398 = vunpack.c.h.b16 %v215
        %v399 = vunpack.c.l.b16 %v216
        %v400 = vunpack.c.l.b16 %v217
        %v401 = vunpack.c.h.b16 %v217
        %v402 = vunpack.c.l.b16 %v218
        %v403 = vunpack.c.l.b16 %v219
        %v404 = vunpack.c.h.b16 %v219
        %v405 = vunpack.c.l.b16 %v220
        %v406 = vunpack.c.l.b16 %v221
        %v407 = vunpack.c.h.b16 %v221
        %v408 = vunpack.c.l.b16 %v222
        %v409 = vunpack.c.l.b16 %v223
        %v410 = vunpack.c.h.b16 %v223
        %v411 = vunpack.c.l.b16 %v224
        %v412 = vunpack.c.l.b16 %v225
        %v413 = vunpack.c.h.b16 %v225
        %v414 = vunpack.c.l.b16 %v226
        %v415 = vunpack.c.l.b16 %v227
        %v416 = vunpack.c.h.b16 %v227
        %v417 = vunpack.c.l.b16 %v228
        %v418 = vunpack.c.l.b16 %v229
        %v419 = vunpack.c.h.b16 %v229
        %v420 = vunpack.c.l.b16 %v230
        %v421 = vunpack.c.l.b16 %v231
        %v422 = vunpack.c.h.b16 %v231
        %v423 = vunpack.c.l.b16 %v232
        %v424 = vunpack.c.l.b16 %v233
        %v425 = vunpack.c.h.b16 %v233
        %v426 = vunpack.c.l.b16 %v234
        %v427 = vunpack.c.l.b16 %v235
        %v428 = vunpack.c.h.b16 %v235
        %v429 = vunpack.c.l.b16 %v236
        %v430 = vpack.c.b16 %v385, %v382
        %v431 = vpack.c.b16 %v386, %v383
        %v432 = vpack.c.b16 %v387, %v384
        %v433 = vpack.c.b16 %v391, %v388
        %v434 = vpack.c.b16 %v392, %v389
        %v435 = vpack.c.b16 %v393, %v390
        %v436 = vpack.c.b16 %v397, %v394
        %v437 = vpack.c.b16 %v398, %v395
        %v438 = vpack.c.b16 %v399, %v396
        %v439 = vpack.c.b16 %v403, %v400
        %v440 = vpack.c.b16 %v404, %v401
        %v441 = vpack.c.b16 %v405, %v402
        %v442 = vpack.c.b16 %v409, %v406
        %v443 = vpack.c.b16 %v410, %v407
        %v444 = vpack.c.b16 %v411, %v408
        %v445 = vpack.c.b16 %v415, %v412
        %v446 = vpack.c.b16 %v416, %v413
        %v447 = vpack.c.b16 %v417, %v414
        %v448 = vpack.c.b16 %v421, %v418
        %v449 = vpack.c.b16 %v422, %v419
        %v450 = vpack.c.b16 %v423, %v420
        %v451 = vpack.c.b16 %v427, %v424
        %v452 = vpack.c.b16 %v428, %v425
        %v453 = vpack.c.b16 %v429, %v426
        %478 = vmatprep.subr.bf16.mxu0 %v452
        %479 = vmatpush1.bf16.msra.mxu0 %v451
        %480 = vmatprep.subr.bf16.mxu0 %v449
        %481 = vmatpush1.bf16.msra.mxu0 %v448
        %482 = vmatprep.subr.bf16.mxu0 %v446
        %483 = vmatpush1.bf16.msra.mxu0 %v445
        %484 = vmatprep.subr.bf16.mxu0 %v443
        %485 = vmatpush1.bf16.msra.mxu0 %v442
        %486 = vmatprep.subr.bf16.mxu0 %v440
        %487 = vmatpush1.bf16.msra.mxu0 %v439
        %488 = vmatprep.subr.bf16.mxu0 %v437
        %489 = vmatpush1.bf16.msra.mxu0 %v436
        %490 = vmatprep.subr.bf16.mxu0 %v434
        %491 = vmatpush1.bf16.msra.mxu0 %v433
        %492 = vmatprep.subr.bf16.mxu0 %v431
        %493 = vmatpush1.bf16.msra.mxu0 %v430
        %494 = vmatprep.subr.bf16.mxu0 0
        %495 = vmatpush2.bf16.msra.mxu0 0
        %496 = vmatprep.subr.bf16.mxu0 0
        %497 = vmatpush2.bf16.msra.mxu0 0
        %498 = vmatprep.subr.bf16.mxu0 0
        %499 = vmatpush2.bf16.msra.mxu0 0
        %500 = vmatprep.subr.bf16.mxu0 0
        %501 = vmatpush2.bf16.msra.mxu0 0
        %502 = vmatprep.subr.bf16.mxu0 0
        %503 = vmatpush2.bf16.msra.mxu0 0
        %504 = vmatprep.subr.bf16.mxu0 0
        %505 = vmatpush2.bf16.msra.mxu0 0
        %506 = vmatprep.subr.bf16.mxu0 0
        %507 = vmatpush2.bf16.msra.mxu0 0
        %508 = vmatprep.subr.bf16.mxu0 0
        %509 = vmatpush2.bf16.msra.mxu0 0
        %510 = vmatprep.mubr.bf16.mxu0 0
        %511 = vmatmul.mubr.bf16.gmra.mxu0 %v318
        %v512 = vpop.f32.mrf.mxu0
        %v513 = vadd.f32 %v242, %v512
        %v514 = vpop.f32.mrf.mxu0
        %v515 = vadd.f32 %v246, %v514
        %v516 = vpop.f32.mrf.mxu0
        %v517 = vadd.f32 %v242, %v516
        %v518 = vpop.f32.mrf.mxu0
        %v519 = vadd.f32 %v246, %v518
        %520 = vmatprep.mubr.bf16.mxu0 0
        %521 = vmatmul.mubr.bf16.gmra.mxu0 %v319
        %v522 = vpop.f32.mrf.mxu0
        %v523 = vadd.f32 %v242, %v522
        %v524 = vpop.f32.mrf.mxu0
        %v525 = vadd.f32 %v246, %v524
        %v526 = vpop.f32.mrf.mxu0
        %v527 = vadd.f32 %v242, %v526
        %v528 = vpop.f32.mrf.mxu0
        %v529 = vadd.f32 %v246, %v528
        %530 = vmatprep.mubr.bf16.mxu0 0
        %531 = vmatmul.mubr.bf16.gmra.mxu0 %v320
        %v532 = vpop.f32.mrf.mxu0
        %v533 = vadd.f32 %v242, %v532
        %v534 = vpop.f32.mrf.mxu0
        %v535 = vadd.f32 %v246, %v534
        %v536 = vpop.f32.mrf.mxu0
        %v537 = vadd.f32 %v242, %v536
        %v538 = vpop.f32.mrf.mxu0
        %v539 = vadd.f32 %v246, %v538
        %540 = vmatprep.mubr.bf16.mxu0 0
        %541 = vmatmul.mubr.bf16.gmra.mxu0 %v321
        %v542 = vpop.f32.mrf.mxu0
        %v543 = vadd.f32 %v242, %v542
        %v544 = vpop.f32.mrf.mxu0
        %v545 = vadd.f32 %v246, %v544
        %v546 = vpop.f32.mrf.mxu0
        %v547 = vadd.f32 %v242, %v546
        %v548 = vpop.f32.mrf.mxu0
        %v549 = vadd.f32 %v246, %v548
        %550 = vmatprep.mubr.bf16.mxu0 0
        %551 = vmatmul.mubr.bf16.gmra.mxu0 %v322
        %v552 = vpop.f32.mrf.mxu0
        %v553 = vadd.f32 %v242, %v552
        %v554 = vpop.f32.mrf.mxu0
        %v555 = vadd.f32 %v246, %v554
        %v556 = vpop.f32.mrf.mxu0
        %v557 = vadd.f32 %v242, %v556
        %v558 = vpop.f32.mrf.mxu0
        %v559 = vadd.f32 %v246, %v558
        %560 = vmatprep.mubr.bf16.mxu0 0
        %561 = vmatmul.mubr.bf16.gmra.mxu0 %v323
        %v562 = vpop.f32.mrf.mxu0
        %v563 = vadd.f32 %v242, %v562
        %v564 = vpop.f32.mrf.mxu0
        %v565 = vadd.f32 %v246, %v564
        %v566 = vpop.f32.mrf.mxu0
        %v567 = vadd.f32 %v242, %v566
        %v568 = vpop.f32.mrf.mxu0
        %v569 = vadd.f32 %v246, %v568
        %570 = vmatprep.mubr.bf16.mxu0 0
        %571 = vmatmul.mubr.bf16.gmra.mxu0 %v324
        %v572 = vpop.f32.mrf.mxu0
        %v573 = vadd.f32 %v242, %v572
        %v574 = vpop.f32.mrf.mxu0
        %v575 = vadd.f32 %v246, %v574
        %v576 = vpop.f32.mrf.mxu0
        %v577 = vadd.f32 %v242, %v576
        %v578 = vpop.f32.mrf.mxu0
        %v579 = vadd.f32 %v246, %v578
        %580 = vmatprep.mubr.bf16.mxu0 0
        %581 = vmatmul.mubr.bf16.gmra.mxu0 %v325
        %v582 = vpop.f32.mrf.mxu0
        %v583 = vadd.f32 %v242, %v582
        %v584 = vpop.f32.mrf.mxu0
        %v585 = vadd.f32 %v246, %v584
        %v586 = vpop.f32.mrf.mxu0
        %v587 = vadd.f32 %v242, %v586
        %v588 = vpop.f32.mrf.mxu0
        %v589 = vadd.f32 %v246, %v588
        %590 = vmatprep.mubr.bf16.mxu0 0
        %591 = vmatmul.mubr.bf16.gmra.mxu0 %v326
        %v592 = vpop.f32.mrf.mxu0
        %v593 = vadd.f32 %v242, %v592
        %v594 = vpop.f32.mrf.mxu0
        %v595 = vadd.f32 %v246, %v594
        %v596 = vpop.f32.mrf.mxu0
        %v597 = vadd.f32 %v242, %v596
        %v598 = vpop.f32.mrf.mxu0
        %v599 = vadd.f32 %v246, %v598
        %600 = vmatprep.mubr.bf16.mxu0 0
        %601 = vmatmul.mubr.bf16.gmra.mxu0 %v327
        %v602 = vpop.f32.mrf.mxu0
        %v603 = vadd.f32 %v242, %v602
        %v604 = vpop.f32.mrf.mxu0
        %v605 = vadd.f32 %v246, %v604
        %v606 = vpop.f32.mrf.mxu0
        %v607 = vadd.f32 %v242, %v606
        %v608 = vpop.f32.mrf.mxu0
        %v609 = vadd.f32 %v246, %v608
        %610 = vmatprep.mubr.bf16.mxu0 0
        %611 = vmatmul.mubr.bf16.gmra.mxu0 %v328
        %v612 = vpop.f32.mrf.mxu0
        %v613 = vadd.f32 %v242, %v612
        %v614 = vpop.f32.mrf.mxu0
        %v615 = vadd.f32 %v246, %v614
        %v616 = vpop.f32.mrf.mxu0
        %v617 = vadd.f32 %v242, %v616
        %v618 = vpop.f32.mrf.mxu0
        %v619 = vadd.f32 %v246, %v618
        %620 = vmatprep.mubr.bf16.mxu0 0
        %621 = vmatmul.mubr.bf16.gmra.mxu0 %v329
        %v622 = vpop.f32.mrf.mxu0
        %v623 = vadd.f32 %v242, %v622
        %v624 = vpop.f32.mrf.mxu0
        %v625 = vadd.f32 %v246, %v624
        %v626 = vpop.f32.mrf.mxu0
        %v627 = vadd.f32 %v242, %v626
        %v628 = vpop.f32.mrf.mxu0
        %v629 = vadd.f32 %v246, %v628
        %630 = vmatprep.mubr.bf16.mxu0 0
        %631 = vmatmul.mubr.bf16.gmra.mxu0 %v330
        %v632 = vpop.f32.mrf.mxu0
        %v633 = vadd.f32 %v242, %v632
        %v634 = vpop.f32.mrf.mxu0
        %v635 = vadd.f32 %v246, %v634
        %v636 = vpop.f32.mrf.mxu0
        %v637 = vadd.f32 %v242, %v636
        %v638 = vpop.f32.mrf.mxu0
        %v639 = vadd.f32 %v246, %v638
        %640 = vmatprep.mubr.bf16.mxu0 0
        %641 = vmatmul.mubr.bf16.gmra.mxu0 %v331
        %v642 = vpop.f32.mrf.mxu0
        %v643 = vadd.f32 %v242, %v642
        %v644 = vpop.f32.mrf.mxu0
        %v645 = vadd.f32 %v246, %v644
        %v646 = vpop.f32.mrf.mxu0
        %v647 = vadd.f32 %v242, %v646
        %v648 = vpop.f32.mrf.mxu0
        %v649 = vadd.f32 %v246, %v648
        %650 = vmatprep.mubr.bf16.mxu0 0
        %651 = vmatmul.mubr.bf16.gmra.mxu0 %v332
        %v652 = vpop.f32.mrf.mxu0
        %v653 = vadd.f32 %v242, %v652
        %v654 = vpop.f32.mrf.mxu0
        %v655 = vadd.f32 %v246, %v654
        %v656 = vpop.f32.mrf.mxu0
        %v657 = vadd.f32 %v242, %v656
        %v658 = vpop.f32.mrf.mxu0
        %v659 = vadd.f32 %v246, %v658
        %660 = vmatprep.mubr.bf16.mxu0 0
        %661 = vmatmul.mubr.bf16.gmra.mxu0 %v333
        %v662 = vpop.f32.mrf.mxu0
        %v663 = vadd.f32 %v242, %v662
        %v664 = vpop.f32.mrf.mxu0
        %v665 = vadd.f32 %v246, %v664
        %v666 = vpop.f32.mrf.mxu0
        %v667 = vadd.f32 %v242, %v666
        %v668 = vpop.f32.mrf.mxu0
        %v669 = vadd.f32 %v246, %v668
        %670 = vdwg.mxu0
        %671 = vmatprep.subr.bf16.mxu0 0
        %672 = vmatpush1.bf16.msra.mxu0 %v453
        %673 = vmatprep.subr.bf16.mxu0 0
        %674 = vmatpush1.bf16.msra.mxu0 %v450
        %675 = vmatprep.subr.bf16.mxu0 0
        %676 = vmatpush1.bf16.msra.mxu0 %v447
        %677 = vmatprep.subr.bf16.mxu0 0
        %678 = vmatpush1.bf16.msra.mxu0 %v444
        %679 = vmatprep.subr.bf16.mxu0 0
        %680 = vmatpush1.bf16.msra.mxu0 %v441
        %681 = vmatprep.subr.bf16.mxu0 0
        %682 = vmatpush1.bf16.msra.mxu0 %v438
        %683 = vmatprep.subr.bf16.mxu0 0
        %684 = vmatpush1.bf16.msra.mxu0 %v435
        %685 = vmatprep.subr.bf16.mxu0 0
        %686 = vmatpush1.bf16.msra.mxu0 %v432
        %687 = vmatprep.subr.bf16.mxu0 0
        %688 = vmatpush2.bf16.msra.mxu0 0
        %689 = vmatprep.subr.bf16.mxu0 0
        %690 = vmatpush2.bf16.msra.mxu0 0
        %691 = vmatprep.subr.bf16.mxu0 0
        %692 = vmatpush2.bf16.msra.mxu0 0
        %693 = vmatprep.subr.bf16.mxu0 0
        %694 = vmatpush2.bf16.msra.mxu0 0
        %695 = vmatprep.subr.bf16.mxu0 0
        %696 = vmatpush2.bf16.msra.mxu0 0
        %697 = vmatprep.subr.bf16.mxu0 0
        %698 = vmatpush2.bf16.msra.mxu0 0
        %699 = vmatprep.subr.bf16.mxu0 0
        %700 = vmatpush2.bf16.msra.mxu0 0
        %701 = vmatprep.subr.bf16.mxu0 0
        %702 = vmatpush2.bf16.msra.mxu0 0
        %703 = vmatprep.mubr.bf16.mxu0 0
        %704 = vmatmul.mubr.bf16.gmra.mxu0 %v318
        %v705 = vpop.f32.mrf.mxu0
        %v706 = vadd.f32 %v250, %v705
        %v707 = vpop.f32.mrf.mxu0
        %v708 = vpop.f32.mrf.mxu0
        %v709 = vadd.f32 %v250, %v708
        %v710 = vpop.f32.mrf.mxu0
        %711 = vmatprep.mubr.bf16.mxu0 0
        %712 = vmatmul.mubr.bf16.gmra.mxu0 %v319
        %v713 = vpop.f32.mrf.mxu0
        %v714 = vadd.f32 %v250, %v713
        %v715 = vpop.f32.mrf.mxu0
        %v716 = vpop.f32.mrf.mxu0
        %v717 = vadd.f32 %v250, %v716
        %v718 = vpop.f32.mrf.mxu0
        %719 = vmatprep.mubr.bf16.mxu0 0
        %720 = vmatmul.mubr.bf16.gmra.mxu0 %v320
        %v721 = vpop.f32.mrf.mxu0
        %v722 = vadd.f32 %v250, %v721
        %v723 = vpop.f32.mrf.mxu0
        %v724 = vpop.f32.mrf.mxu0
        %v725 = vadd.f32 %v250, %v724
        %v726 = vpop.f32.mrf.mxu0
        %727 = vmatprep.mubr.bf16.mxu0 0
        %728 = vmatmul.mubr.bf16.gmra.mxu0 %v321
        %v729 = vpop.f32.mrf.mxu0
        %v730 = vadd.f32 %v250, %v729
        %v731 = vpop.f32.mrf.mxu0
        %v732 = vpop.f32.mrf.mxu0
        %v733 = vadd.f32 %v250, %v732
        %v734 = vpop.f32.mrf.mxu0
        %735 = vmatprep.mubr.bf16.mxu0 0
        %736 = vmatmul.mubr.bf16.gmra.mxu0 %v322
        %v737 = vpop.f32.mrf.mxu0
        %v738 = vadd.f32 %v250, %v737
        %v739 = vpop.f32.mrf.mxu0
        %v740 = vpop.f32.mrf.mxu0
        %v741 = vadd.f32 %v250, %v740
        %v742 = vpop.f32.mrf.mxu0
        %743 = vmatprep.mubr.bf16.mxu0 0
        %744 = vmatmul.mubr.bf16.gmra.mxu0 %v323
        %v745 = vpop.f32.mrf.mxu0
        %v746 = vadd.f32 %v250, %v745
        %v747 = vpop.f32.mrf.mxu0
        %v748 = vpop.f32.mrf.mxu0
        %v749 = vadd.f32 %v250, %v748
        %v750 = vpop.f32.mrf.mxu0
        %751 = vmatprep.mubr.bf16.mxu0 0
        %752 = vmatmul.mubr.bf16.gmra.mxu0 %v324
        %v753 = vpop.f32.mrf.mxu0
        %v754 = vadd.f32 %v250, %v753
        %v755 = vpop.f32.mrf.mxu0
        %v756 = vpop.f32.mrf.mxu0
        %v757 = vadd.f32 %v250, %v756
        %v758 = vpop.f32.mrf.mxu0
        %759 = vmatprep.mubr.bf16.mxu0 0
        %760 = vmatmul.mubr.bf16.gmra.mxu0 %v325
        %v761 = vpop.f32.mrf.mxu0
        %v762 = vadd.f32 %v250, %v761
        %v763 = vpop.f32.mrf.mxu0
        %v764 = vpop.f32.mrf.mxu0
        %v765 = vadd.f32 %v250, %v764
        %v766 = vpop.f32.mrf.mxu0
        %767 = vmatprep.mubr.bf16.mxu0 0
        %768 = vmatmul.mubr.bf16.gmra.mxu0 %v326
        %v769 = vpop.f32.mrf.mxu0
        %v770 = vadd.f32 %v250, %v769
        %v771 = vpop.f32.mrf.mxu0
        %v772 = vpop.f32.mrf.mxu0
        %v773 = vadd.f32 %v250, %v772
        %v774 = vpop.f32.mrf.mxu0
        %775 = vmatprep.mubr.bf16.mxu0 0
        %776 = vmatmul.mubr.bf16.gmra.mxu0 %v327
        %v777 = vpop.f32.mrf.mxu0
        %v778 = vadd.f32 %v250, %v777
        %v779 = vpop.f32.mrf.mxu0
        %v780 = vpop.f32.mrf.mxu0
        %v781 = vadd.f32 %v250, %v780
        %v782 = vpop.f32.mrf.mxu0
        %783 = vmatprep.mubr.bf16.mxu0 0
        %784 = vmatmul.mubr.bf16.gmra.mxu0 %v328
        %v785 = vpop.f32.mrf.mxu0
        %v786 = vadd.f32 %v250, %v785
        %v787 = vpop.f32.mrf.mxu0
        %v788 = vpop.f32.mrf.mxu0
        %v789 = vadd.f32 %v250, %v788
        %v790 = vpop.f32.mrf.mxu0
        %791 = vmatprep.mubr.bf16.mxu0 0
        %792 = vmatmul.mubr.bf16.gmra.mxu0 %v329
        %v793 = vpop.f32.mrf.mxu0
        %v794 = vadd.f32 %v250, %v793
        %v795 = vpop.f32.mrf.mxu0
        %v796 = vpop.f32.mrf.mxu0
        %v797 = vadd.f32 %v250, %v796
        %v798 = vpop.f32.mrf.mxu0
        %799 = vmatprep.mubr.bf16.mxu0 0
        %800 = vmatmul.mubr.bf16.gmra.mxu0 %v330
        %v801 = vpop.f32.mrf.mxu0
        %v802 = vadd.f32 %v250, %v801
        %v803 = vpop.f32.mrf.mxu0
        %v804 = vpop.f32.mrf.mxu0
        %v805 = vadd.f32 %v250, %v804
        %v806 = vpop.f32.mrf.mxu0
        %807 = vmatprep.mubr.bf16.mxu0 0
        %808 = vmatmul.mubr.bf16.gmra.mxu0 %v331
        %v809 = vpop.f32.mrf.mxu0
        %v810 = vadd.f32 %v250, %v809
        %v811 = vpop.f32.mrf.mxu0
        %v812 = vpop.f32.mrf.mxu0
        %v813 = vadd.f32 %v250, %v812
        %v814 = vpop.f32.mrf.mxu0
        %815 = vmatprep.mubr.bf16.mxu0 0
        %816 = vmatmul.mubr.bf16.gmra.mxu0 %v332
        %v817 = vpop.f32.mrf.mxu0
        %v818 = vadd.f32 %v250, %v817
        %v819 = vpop.f32.mrf.mxu0
        %v820 = vpop.f32.mrf.mxu0
        %v821 = vadd.f32 %v250, %v820
        %v822 = vpop.f32.mrf.mxu0
        %823 = vmatprep.mubr.bf16.mxu0 0
        %824 = vmatmul.mubr.bf16.gmra.mxu0 %v333
        %v825 = vpop.f32.mrf.mxu0
        %v826 = vadd.f32 %v250, %v825
        %v827 = vpop.f32.mrf.mxu0
        %v828 = vpop.f32.mrf.mxu0
        %v829 = vadd.f32 %v250, %v828
        %v830 = vpop.f32.mrf.mxu0
        %831 = vdwg.mxu0
        %832 = vst [vmem:[%s164] sm:$0xff] %v513
        %833 = vst [vmem:[%s164 + $0x8] sm:$0xff] %v515
        %834 = vst [vmem:[%s164 + $0x10] sm:$0xff] %v706
        %835 = vst [vmem:[%s164 + $0x18] sm:$0xff] %v517
        %836 = vst [vmem:[%s164 + $0x20] sm:$0xff] %v519
        %837 = vst [vmem:[%s164 + $0x28] sm:$0xff] %v709
        %838 = vst [vmem:[%s164 + $0x30] sm:$0xff] %v523
        %839 = vst [vmem:[%s164 + $0x38] sm:$0xff] %v525
        %840 = vst [vmem:[%s164 + $0x40] sm:$0xff] %v714
        %841 = vst [vmem:[%s164 + $0x48] sm:$0xff] %v527
        %842 = vst [vmem:[%s164 + $0x50] sm:$0xff] %v529
        %843 = vst [vmem:[%s164 + $0x58] sm:$0xff] %v717
        %844 = vst [vmem:[%s164 + $0x60] sm:$0xff] %v533
        %845 = vst [vmem:[%s164 + $0x68] sm:$0xff] %v535
        %846 = vst [vmem:[%s164 + $0x70] sm:$0xff] %v722
        %847 = vst [vmem:[%s164 + $0x78] sm:$0xff] %v537
        %848 = vst [vmem:[%s164 + $0x80] sm:$0xff] %v539
        %849 = vst [vmem:[%s164 + $0x88] sm:$0xff] %v725
        %850 = vst [vmem:[%s164 + $0x90] sm:$0xff] %v543
        %851 = vst [vmem:[%s164 + $0x98] sm:$0xff] %v545
        %852 = vst [vmem:[%s164 + $0xa0] sm:$0xff] %v730
        %853 = vst [vmem:[%s164 + $0xa8] sm:$0xff] %v547
        %854 = vst [vmem:[%s164 + $0xb0] sm:$0xff] %v549
        %855 = vst [vmem:[%s164 + $0xb8] sm:$0xff] %v733
        %856 = vst [vmem:[%s164 + $0xc0] sm:$0xff] %v553
        %857 = vst [vmem:[%s164 + $0xc8] sm:$0xff] %v555
        %858 = vst [vmem:[%s164 + $0xd0] sm:$0xff] %v738
        %859 = vst [vmem:[%s164 + $0xd8] sm:$0xff] %v557
        %860 = vst [vmem:[%s164 + $0xe0] sm:$0xff] %v559
        %861 = vst [vmem:[%s164 + $0xe8] sm:$0xff] %v741
        %862 = vst [vmem:[%s164 + $0xf0] sm:$0xff] %v563
        %863 = vst [vmem:[%s164 + $0xf8] sm:$0xff] %v565
        %864 = vst [vmem:[%s164 + $0x100] sm:$0xff] %v746
        %865 = vst [vmem:[%s164 + $0x108] sm:$0xff] %v567
        %866 = vst [vmem:[%s164 + $0x110] sm:$0xff] %v569
        %867 = vst [vmem:[%s164 + $0x118] sm:$0xff] %v749
        %868 = vst [vmem:[%s164 + $0x120] sm:$0xff] %v573
        %869 = vst [vmem:[%s164 + $0x128] sm:$0xff] %v575
        %870 = vst [vmem:[%s164 + $0x130] sm:$0xff] %v754
        %871 = vst [vmem:[%s164 + $0x138] sm:$0xff] %v577
        %872 = vst [vmem:[%s164 + $0x140] sm:$0xff] %v579
        %873 = vst [vmem:[%s164 + $0x148] sm:$0xff] %v757
        %874 = vst [vmem:[%s164 + $0x150] sm:$0xff] %v583
        %875 = vst [vmem:[%s164 + $0x158] sm:$0xff] %v585
        %876 = vst [vmem:[%s164 + $0x160] sm:$0xff] %v762
        %877 = vst [vmem:[%s164 + $0x168] sm:$0xff] %v587
        %878 = vst [vmem:[%s164 + $0x170] sm:$0xff] %v589
        %879 = vst [vmem:[%s164 + $0x178] sm:$0xff] %v765
        %880 = vst [vmem:[%s164 + $0x180] sm:$0xff] %v593
        %881 = vst [vmem:[%s164 + $0x188] sm:$0xff] %v595
        %882 = vst [vmem:[%s164 + $0x190] sm:$0xff] %v770
        %883 = vst [vmem:[%s164 + $0x198] sm:$0xff] %v597
        %884 = vst [vmem:[%s164 + $0x1a0] sm:$0xff] %v599
        %885 = vst [vmem:[%s164 + $0x1a8] sm:$0xff] %v773
        %886 = vst [vmem:[%s164 + $0x1b0] sm:$0xff] %v603
        %887 = vst [vmem:[%s164 + $0x1b8] sm:$0xff] %v605
        %888 = vst [vmem:[%s164 + $0x1c0] sm:$0xff] %v778
        %889 = vst [vmem:[%s164 + $0x1c8] sm:$0xff] %v607
        %890 = vst [vmem:[%s164 + $0x1d0] sm:$0xff] %v609
        %891 = vst [vmem:[%s164 + $0x1d8] sm:$0xff] %v781
        %892 = vst [vmem:[%s164 + $0x1e0] sm:$0xff] %v613
        %893 = vst [vmem:[%s164 + $0x1e8] sm:$0xff] %v615
        %894 = vst [vmem:[%s164 + $0x1f0] sm:$0xff] %v786
        %895 = vst [vmem:[%s164 + $0x1f8] sm:$0xff] %v617
        %896 = vst [vmem:[%s164 + $0x200] sm:$0xff] %v619
        %897 = vst [vmem:[%s164 + $0x208] sm:$0xff] %v789
        %898 = vst [vmem:[%s164 + $0x210] sm:$0xff] %v623
        %899 = vst [vmem:[%s164 + $0x218] sm:$0xff] %v625
        %900 = vst [vmem:[%s164 + $0x220] sm:$0xff] %v794
        %901 = vst [vmem:[%s164 + $0x228] sm:$0xff] %v627
        %902 = vst [vmem:[%s164 + $0x230] sm:$0xff] %v629
        %903 = vst [vmem:[%s164 + $0x238] sm:$0xff] %v797
        %904 = vst [vmem:[%s164 + $0x240] sm:$0xff] %v633
        %905 = vst [vmem:[%s164 + $0x248] sm:$0xff] %v635
        %906 = vst [vmem:[%s164 + $0x250] sm:$0xff] %v802
        %907 = vst [vmem:[%s164 + $0x258] sm:$0xff] %v637
        %908 = vst [vmem:[%s164 + $0x260] sm:$0xff] %v639
        %909 = vst [vmem:[%s164 + $0x268] sm:$0xff] %v805
        %910 = vst [vmem:[%s164 + $0x270] sm:$0xff] %v643
        %911 = vst [vmem:[%s164 + $0x278] sm:$0xff] %v645
        %912 = vst [vmem:[%s164 + $0x280] sm:$0xff] %v810
        %913 = vst [vmem:[%s164 + $0x288] sm:$0xff] %v647
        %914 = vst [vmem:[%s164 + $0x290] sm:$0xff] %v649
        %915 = vst [vmem:[%s164 + $0x298] sm:$0xff] %v813
        %916 = vst [vmem:[%s164 + $0x2a0] sm:$0xff] %v653
        %917 = vst [vmem:[%s164 + $0x2a8] sm:$0xff] %v655
        %918 = vst [vmem:[%s164 + $0x2b0] sm:$0xff] %v818
        %919 = vst [vmem:[%s164 + $0x2b8] sm:$0xff] %v657
        %920 = vst [vmem:[%s164 + $0x2c0] sm:$0xff] %v659
        %921 = vst [vmem:[%s164 + $0x2c8] sm:$0xff] %v821
        %922 = vst [vmem:[%s164 + $0x2d0] sm:$0xff] %v663
        %923 = vst [vmem:[%s164 + $0x2d8] sm:$0xff] %v665
        %924 = vst [vmem:[%s164 + $0x2e0] sm:$0xff] %v826
        %925 = vst [vmem:[%s164 + $0x2e8] sm:$0xff] %v667
        %926 = vst [vmem:[%s164 + $0x2f0] sm:$0xff] %v669
        %927 = vst [vmem:[%s164 + $0x2f8] sm:$0xff] %v829
        %s928 = sand.u32 %s93, 1
        %s929 = scalar_lea.sflag [#allocation3], %s928
        %s930 = sand.u32 %s93, 1
        %s931 = smul.addr %s930, 768
        %s932 = scalar_lea.vmem [#allocation2], %s931
        // Predicated region
        $region33: #{qkv_lowrank_forward.1} parent=31 // pred_check
          %p933 = pneg %p103
        $region34: #{qkv_lowrank_forward.1} parent=31 // pred_check_branch
          %935 = sbr.rel (%p933) target = $region36
        $region35: #{qkv_lowrank_forward.1} parent=31 // pred_region
          %s936 = smul.u32 32, %s17
          %s938 = ssub.s32 12288, 12288
          %939 = vsyncadd %s929, %s938
          %s940 = smul.addr %s936, 3
          %s941 = smul.addr %s940, 128
          %s942 = scalar_lea.hbm %s3, %s941
          %s943 = sshll.u32 %s932, 4
          %s944 = int_to_ptr.vmem [resolvable:$true] %s943
          %949 = dma.vmem_to_hbm [thread:$0]  %s944, 12288, %s942, %s929, 384, 384, 24
        $region36: #{qkv_lowrank_forward.1} parent=31 // pred_fallthru
          _
      $region32: #{qkv_lowrank_forward.1} parent=5 // pred_fallthru
        _
      %p950 = scmp.le.s32.totalorder 2, %s12
      // Predicated region
      $region37: #{qkv_lowrank_forward.1} parent=5 // pred_check
        %p951 = pneg %p950
      $region38: #{qkv_lowrank_forward.1} parent=5 // pred_check_branch
        %953 = sbr.rel (%p951) target = $region40
      $region39: #{qkv_lowrank_forward.1} parent=5 // pred_region
        %s954 = ssub.s32 %s12, 2
        // Predicated region
        $region41: #{qkv_lowrank_forward.1} parent=39 // pred_check
          %p955 = pneg %p109
        $region42: #{qkv_lowrank_forward.1} parent=39 // pred_check_branch
          %957 = sbr.rel (%p955) target = $region44
        $region43: #{qkv_lowrank_forward.1} parent=39 // pred_region
          %s958 = sand.u32 %s94, 1
          %s959 = scalar_lea.sflag [#allocation3], %s958
          %s960 = sand.u32 %s94, 1
          %s961 = smul.addr %s960, 768
          %s962 = scalar_lea.vmem [#allocation2], %s961
          %963 = dma.done %s959, 12288
        $region44: #{qkv_lowrank_forward.1} parent=39 // pred_fallthru
          _
      $region40: #{qkv_lowrank_forward.1} parent=5 // pred_fallthru
        _
    $region6: #{qkv_lowrank_forward.1} parent=1 // loop_footer
      %s16 = sadd.s32 1, %s12
    $region7: #{qkv_lowrank_forward.1} parent=1 // loop_footer_branch
      %11 = sbr.rel target = $region3
    $region8: #{qkv_lowrank_forward.1} parent=1 // loop_exit
      _
    %964 = vsyncpa [#allocation3], 1
    %s965 = scalar_lea.sflag [#allocation3], 1
    %966 = vsyncpa %s965, 1

</llo_original>
